<compile_context>
chip_gen: v5e
topology: v5e:2x2
jax: 0.10.0
libtpu: 0.0.40
codegen_flags: <defaults>
</compile_context>

<pallas_src>
import functools

import jax
import jax.numpy as jnp
from jax import lax
from jax.experimental import pallas as pl
from jax.experimental.pallas import tpu as pltpu


PACK = 4          # logical rows packed per 128-lane row (4 * F_out = 128 lanes)
ROW_ALIGN = 8     # sublane alignment for the packed-row axis


def _round_up(x, m):
    return ((x + m - 1) // m) * m


def fuse_time2vec_params(w, b, w0, b0, pack=PACK):
    """Fuse (w, b, w0, b0) into a single lane-dense packed weight/bias.

    Call ONCE per parameter set (outside the per-forward path).
      w_packed : (pack*F_in, pack*F_out) block-diagonal
      b_packed : (1, pack*F_out) tiled bias
    so (tau packed row-major, pack rows per packed row) @ w_packed + b_packed
    yields pack logical output rows side by side along the lane axis.
    """
    w_full = jnp.concatenate([w, w0], axis=-1)                        # (F_in, F_out)
    b_full = jnp.concatenate([b.reshape(-1), b0.reshape(-1)], -1)     # (F_out,)
    f_in, f_out = w_full.shape
    w_packed = jnp.kron(jnp.eye(pack, dtype=w_full.dtype), w_full)    # (p*F_in, p*F_out)
    b_packed = jnp.tile(b_full, pack).reshape(1, pack * f_out)        # (1, p*F_out)
    return w_packed, b_packed, f_in, f_out


def _choose_tm(rows, tm_max=8192, split_threshold=1024):
    """rows is a multiple of 8.  Pick the largest tile up to tm_max; when
    there is enough work, force an EVEN number (>=2) of grid steps so the
    'parallel' axis splits evenly across v7x's two TensorCores."""
    tm = min(rows, tm_max)
    if rows >= split_threshold:
        steps = pl.cdiv(rows, tm)
        if steps < 2 or steps % 2 == 1:
            steps = max(2, steps + (steps % 2))
            tm = _round_up(pl.cdiv(rows, steps), ROW_ALIGN)
    return tm


def _sine_kernel(tau_ref, w_ref, b_ref, o_ref, *, f_out):
    # tau_ref: (tm, pack*F_in)  w_ref: (pack*F_in, pack*F_out)  b_ref: (1, pack*F_out)
    # K=16, N=128 contraction -> MXU (vmatmul); accumulate in f32.
    z = jnp.dot(tau_ref[...], w_ref[...], preferred_element_type=jnp.float32)
    z = z + b_ref[...]                                   # broadcast (1, pack*F_out)
    f_out_packed = o_ref.shape[1]
    # (1, 128) mask, broadcast by the select: sin on lanes where
    # (lane % F_out) != F_out-1, identity on the last lane of each packed row.
    col = lax.broadcasted_iota(jnp.int32, (1, f_out_packed), 1)
    is_sin = (col % f_out) != (f_out - 1)
    o_ref[...] = jnp.where(is_sin, jnp.sin(z), z).astype(o_ref.dtype)


def sine_activation(tau, w_packed, b_packed, f_out, *, tm=None):
    """tau: (N, F_in); w_packed: (PACK*F_in, PACK*F_out); b_packed: (1, PACK*F_out).
    Returns (N, F_out) = concat([sin(tau@w+b), tau@w0+b0], -1)."""
    n, f_in = tau.shape
    f_out_packed = w_packed.shape[1]
    pack = f_out_packed // f_out
    assert w_packed.shape[0] == pack * f_in

    # Pad N so the packed-row axis is a multiple of 8 (sublane) and the
    # (N, F_in) -> (rows, pack*F_in) reshape is a free row-major bitcast.
    n_pad = _round_up(n, pack * ROW_ALIGN)
    if n_pad != n:
        tau = jnp.pad(tau, ((0, n_pad - n), (0, 0)))
    rows = n_pad // pack
    tau_packed = tau.reshape(rows, pack * f_in)

    if tm is None:
        tm = _choose_tm(rows)
    tm = min(_round_up(tm, ROW_ALIGN), rows)

    grid = (pl.cdiv(rows, tm),)   # ragged last block handled by Pallas masking

    out_packed = pl.pallas_call(
        functools.partial(_sine_kernel, f_out=f_out),
        out_shape=jax.ShapeDtypeStruct((rows, f_out_packed), tau.dtype),
        grid_spec=pltpu.PrefetchScalarGridSpec(
            num_scalar_prefetch=0,
            grid=grid,
            in_specs=[
                pl.BlockSpec((tm, pack * f_in), lambda i: (i, 0)),        # tau tile
                pl.BlockSpec((pack * f_in, f_out_packed), lambda i: (0, 0)),  # resident W
                pl.BlockSpec((1, f_out_packed), lambda i: (0, 0)),            # resident b
            ],
            out_specs=pl.BlockSpec((tm, f_out_packed), lambda i: (i, 0)),
        ),
        compiler_params=pltpu.CompilerParams(
            dimension_semantics=("parallel",)),
    )(tau_packed, w_packed, b_packed)

    out = out_packed.reshape(n_pad, f_out)      # free row-major reshape
    if n_pad != n:
        out = out[:n]
    return out


def _reference(tau, w, b, w0, b0):
    v1 = jnp.sin(tau @ w + b)
    v2 = tau @ w0 + b0
    return jnp.concatenate([v1, v2], axis=-1)


if __name__ == "__main__":
    # Shapes consistent with the module: in_features=4, out_features=32
    in_features, out_features = 4, 32

    key = jax.random.PRNGKey(0)
    k_tau, k_tau2, k_tau3, k_w0, k_b0, k_w, k_b = jax.random.split(key, 7)

    # Deterministic "torch.randn"-like parameter init (shapes from __init__)
    w0 = jax.random.normal(k_w0, (in_features, 1), dtype=jnp.float32)
    b0 = jax.random.normal(k_b0, (1,), dtype=jnp.float32)
    w = jax.random.normal(k_w, (in_features, out_features - 1), dtype=jnp.float32)
    b = jax.random.normal(k_b, (out_features - 1,), dtype=jnp.float32)

    # Fuse + lane-pack parameters once (hoisted out of the per-call path).
    w_packed, b_packed, f_in, f_out = fuse_time2vec_params(w, b, w0, b0)

    # 1) tiny batch (single tile, rows padded to the 8-sublane minimum)
    tau = jax.random.normal(k_tau, (16, in_features), dtype=jnp.float32)
    out = jax.block_until_ready(sine_activation(tau, w_packed, b_packed, f_out))
    ref = _reference(tau, w, b, w0, b0)
    assert out.shape == (16, out_features)
    assert jnp.allclose(out, ref, atol=1e-5, rtol=1e-5)

    # 2) batch not a multiple of PACK (exercises row padding + slice-back)
    tau2 = jax.random.normal(k_tau2, (602, in_features), dtype=jnp.float32)
    out2 = jax.block_until_ready(sine_activation(tau2, w_packed, b_packed, f_out))
    ref2 = _reference(tau2, w, b, w0, b0)
    assert out2.shape == (602, out_features)
    assert jnp.allclose(out2, ref2, atol=1e-5, rtol=1e-5)

    # 3) larger batch exercising the >=2, even-step 'parallel' grid (v7x
    #    megacore split) plus a ragged last block.
    tau3 = jax.random.normal(k_tau3, (4100, in_features), dtype=jnp.float32)
    out3 = jax.block_until_ready(sine_activation(tau3, w_packed, b_packed, f_out))
    ref3 = _reference(tau3, w, b, w0, b0)
    assert out3.shape == (4100, out_features)
    assert jnp.allclose(out3, ref3, atol=1e-5, rtol=1e-5)

    print("KERNEL_OK")
</pallas_src>

<mosaic_0001>
module attributes {stable_mosaic.version = 11 : i64} {
  func.func @_sine_kernel(%arg0: i32, %arg1: memref<8x16xf32, #tpu.memory_space<vmem>>, %arg2: memref<16x128xf32, #tpu.memory_space<vmem>>, %arg3: memref<1x128xf32, #tpu.memory_space<vmem>>, %arg4: memref<8x128xf32, #tpu.memory_space<vmem>>) attributes {dimension_semantics = [#tpu.dimension_semantics<parallel>], iteration_bounds = array<i64: 1>, scalar_prefetch = 0 : i64, scratch_operands = 0 : i64, tpu.core_type = #tpu.core_type<tc>, window_params = [{transform_indices = @transform_0, window_bounds = array<i64: 8, 16>}, {pipeline_mode = #tpu.pipeline_mode<synchronous>, transform_indices = @transform_1, window_bounds = array<i64: 16, 128>}, {pipeline_mode = #tpu.pipeline_mode<synchronous>, transform_indices = @transform_2, window_bounds = array<i64: 1, 128>}, {transform_indices = @transform_3, window_bounds = array<i64: 8, 128>}]} {
    %c0 = arith.constant 0 : index
    %c0_0 = arith.constant 0 : index
    %0 = vector.load %arg1[%c0, %c0_0] : memref<8x16xf32, #tpu.memory_space<vmem>>, vector<8x16xf32>
    %c0_1 = arith.constant 0 : index
    %c0_2 = arith.constant 0 : index
    %1 = vector.load %arg2[%c0_1, %c0_2] : memref<16x128xf32, #tpu.memory_space<vmem>>, vector<16x128xf32>
    %cst = arith.constant dense<0.000000e+00> : vector<8x128xf32>
    %2 = tpu.matmul %0, %1, %cst {dimension_numbers = #tpu.dot_dimension_numbers<[1], [0], [0], [1], [0, 0, 1, 1], [], []>} : vector<8x16xf32>, vector<16x128xf32>, vector<8x128xf32> -> vector<8x128xf32>
    %c0_3 = arith.constant 0 : index
    %c0_4 = arith.constant 0 : index
    %3 = vector.load %arg3[%c0_3, %c0_4] : memref<1x128xf32, #tpu.memory_space<vmem>>, vector<1x128xf32>
    %4 = vector.broadcast %3 : vector<1x128xf32> to vector<8x128xf32>
    %5 = arith.addf %2, %4 : vector<8x128xf32>
    %6 = tpu.iota {dimensions = array<i32: 1>} : vector<1x128xi32>
    %c32_i32 = arith.constant 32 : i32
    %c0_i32 = arith.constant 0 : i32
    %7 = arith.cmpi eq, %c32_i32, %c0_i32 : i32
    %c1_i32 = arith.constant 1 : i32
    %8 = arith.select %7, %c1_i32, %c32_i32 : i32
    %9 = vector.broadcast %8 : i32 to vector<1x128xi32>
    %10 = arith.remsi %6, %9 : vector<1x128xi32>
    %c0_i32_5 = arith.constant 0 : i32
    %11 = vector.broadcast %c0_i32_5 : i32 to vector<1x128xi32>
    %12 = arith.cmpi ne, %10, %11 : vector<1x128xi32>
    %c0_i32_6 = arith.constant 0 : i32
    %13 = vector.broadcast %c0_i32_6 : i32 to vector<1x128xi32>
    %14 = arith.cmpi slt, %10, %13 : vector<1x128xi32>
    %c0_i32_7 = arith.constant 0 : i32
    %15 = arith.cmpi slt, %8, %c0_i32_7 : i32
    %16 = vector.broadcast %15 : i1 to vector<1x128xi1>
    %17 = vector.broadcast %16 : vector<1x128xi1> to vector<1x128xi1>
    %18 = arith.xori %14, %17 : vector<1x128xi1>
    %19 = arith.andi %18, %12 : vector<1x128xi1>
    %20 = vector.broadcast %8 : i32 to vector<1x128xi32>
    %21 = arith.addi %10, %20 : vector<1x128xi32>
    %22 = arith.select %19, %21, %10 : vector<1x128xi1>, vector<1x128xi32>
    %c31_i32 = arith.constant 31 : i32
    %23 = vector.broadcast %c31_i32 : i32 to vector<1x128xi32>
    %24 = arith.cmpi ne, %22, %23 : vector<1x128xi32>
    %25 = math.sin %5 : vector<8x128xf32>
    %26 = vector.shape_cast %24 : vector<1x128xi1> to vector<1x128xi1>
    %27 = vector.broadcast %26 : vector<1x128xi1> to vector<8x128xi1>
    %28 = arith.select %27, %25, %5 : vector<8x128xi1>, vector<8x128xf32>
    %c0_8 = arith.constant 0 : index
    %c0_9 = arith.constant 0 : index
    %29 = vector.load %arg4[%c0_8, %c0_9] : memref<8x128xf32, #tpu.memory_space<vmem>>, vector<8x128xf32>
    tpu.vector_store %arg4[%c0_8, %c0_9], %28 {strides = array<i32>} : memref<8x128xf32, #tpu.memory_space<vmem>>, vector<8x128xf32>,
    return
  }
  func.func @transform_0(%arg0: i32) -> (i32, i32) {
    %c0_i32 = arith.constant 0 : i32
    %c0_i32_0 = arith.constant 0 : i32
    return %arg0, %c0_i32 : i32, i32
  }
  func.func @transform_1(%arg0: i32) -> (i32, i32) {
    %c0_i32 = arith.constant 0 : i32
    %c0_i32_0 = arith.constant 0 : i32
    %c0_i32_1 = arith.constant 0 : i32
    return %c0_i32, %c0_i32_0 : i32, i32
  }
  func.func @transform_2(%arg0: i32) -> (i32, i32) {
    %c0_i32 = arith.constant 0 : i32
    %c0_i32_0 = arith.constant 0 : i32
    %c0_i32_1 = arith.constant 0 : i32
    return %c0_i32, %c0_i32_0 : i32, i32
  }
  func.func @transform_3(%arg0: i32) -> (i32, i32) {
    %c0_i32 = arith.constant 0 : i32
    %c0_i32_0 = arith.constant 0 : i32
    return %arg0, %c0_i32 : i32, i32
  }
}

</mosaic_0001>

<llo_original>
// kernel: tpu_custom_call.1
$region0: #{tpu_custom_call.1}
  #allocation0 [shape = 'u32[]', space=smem, size = 0x4, offset = 0x4, fixed_abs, tag = 'smem constant byte address 0x4 - core index']
  #allocation1 [shape = 'u32[72,128]{1,0:T(1,128)}', space=vmem, size = 0x9000, scoped, tag = 'internal scratch']
  %s0 = inlined_call_operand.hbm [shape: f32[8,16], index: 0, kind: input, shape index: {}]
  %s1 = inlined_call_operand.hbm [shape: f32[16,128], index: 1, kind: input, shape index: {}]
  %s2 = inlined_call_operand.vmem [shape: f32[1,128], index: 2, kind: input, shape index: {}]
  %s3 = inlined_call_operand.hbm [shape: f32[8,128], index: 3, kind: output, shape index: {}]
  %s4 = sld [smem:[#allocation0]]
  $region30: #{tpu_custom_call.1} parent=0
    _
  %s6 = ssub.s32 1, %s4
  %s7 = scalar_select 0, %s6, %s4
  $region1: #{tpu_custom_call.1} parent=0
    #allocation2 [shape = 'u8[4096]{0}', space=vmem, size = 0x1000, scoped, tag = 'input window, operand 0, single buffered']
    #allocation3 [shape = 's32[1]{0}', space=sflag, size = 0x4, scoped, tag = 'scoped memory for tpu_custom_call.1']
    #allocation4 [shape = 's32[1]{0}', space=sflag, size = 0x4, scoped, tag = 'scoped memory for tpu_custom_call.1']
    #allocation5 [shape = 'u8[8192]{0}', space=vmem, size = 0x2000, scoped, tag = 'input window, operand 1, single buffered']
    #allocation6 [shape = 's32[1]{0}', space=sflag, size = 0x4, scoped, tag = 'scoped memory for tpu_custom_call.1']
    #allocation7 [shape = 'u8[4096]{0}', space=vmem, size = 0x1000, scoped, tag = 'output window, operand 0, single buffered']
    %8 = vsyncpa [#allocation3], 0
    %9 = vsyncpa [#allocation6], 0
    %10 = vsyncpa [#allocation4], 0
    // Predicated region
    $region2: #{tpu_custom_call.1} parent=1 // pred_check
      _
    $region3: #{tpu_custom_call.1} parent=1 // pred_check_branch
      %12 = sbr.rel (0) target = $region5
    $region4: #{tpu_custom_call.1} parent=1 // pred_region
      %14 = vsyncadd [#allocation3], 0
      %s16 = sshll.u32 %s0, 4
      %s17 = int_to_ptr.hbm [resolvable:$true] %s16
      %s18 = sshll.u32 [#allocation2], 4
      %s19 = int_to_ptr.vmem [resolvable:$true] %s18
      %21 = dma.hbm_to_vmem [thread:$0]  %s17, 128, %s19, [#allocation3]
    $region5: #{tpu_custom_call.1} parent=1 // pred_fallthru
      _
    // Predicated region
    $region6: #{tpu_custom_call.1} parent=1 // pred_check
      _
    $region7: #{tpu_custom_call.1} parent=1 // pred_check_branch
      %23 = sbr.rel (0) target = $region9
    $region8: #{tpu_custom_call.1} parent=1 // pred_region
      %25 = vsyncadd [#allocation6], 0
      %s26 = sshll.u32 %s1, 4
      %s27 = int_to_ptr.hbm [resolvable:$true] %s26
      %s28 = sshll.u32 [#allocation5], 4
      %s29 = int_to_ptr.vmem [resolvable:$true] %s28
      %34 = dma.hbm_to_vmem [thread:$0]  %s27, 256, %s29, [#allocation6], 128, 128, 8
    $region9: #{tpu_custom_call.1} parent=1 // pred_fallthru
      _
    // Predicated region
    $region10: #{tpu_custom_call.1} parent=1 // pred_check
      _
    $region11: #{tpu_custom_call.1} parent=1 // pred_check_branch
      %36 = sbr.rel (0) target = $region13
    $region12: #{tpu_custom_call.1} parent=1 // pred_region
      _
    $region13: #{tpu_custom_call.1} parent=1 // pred_fallthru
      _
    // Predicated region
    $region14: #{tpu_custom_call.1} parent=1 // pred_check
      _
    $region15: #{tpu_custom_call.1} parent=1 // pred_check_branch
      %38 = sbr.rel (0) target = $region17
    $region16: #{tpu_custom_call.1} parent=1 // pred_region
      %40 = dma.done [#allocation3], 128
    $region17: #{tpu_custom_call.1} parent=1 // pred_fallthru
      _
    // Predicated region
    $region18: #{tpu_custom_call.1} parent=1 // pred_check
      _
    $region19: #{tpu_custom_call.1} parent=1 // pred_check_branch
      %42 = sbr.rel (0) target = $region21
    $region20: #{tpu_custom_call.1} parent=1 // pred_region
      %44 = dma.done [#allocation6], 256
    $region21: #{tpu_custom_call.1} parent=1 // pred_fallthru
      _
    %v45 = vld [vmem:[#allocation2] sm:$0xff]
    %v46 = vld [vmem:[#allocation5] sm:$0xff]
    %v47 = vld [vmem:[#allocation5 + $0x8] sm:$0xff]
    %v48 = vld [vmem:[%s2] sm:$0x1]
    %v50 = vperm.slane %v48, 0
    %vm52 = vcmask 130048
    %v54 = vsel %vm52, %v45, 0
    %56 = vmatpush.msra.mxu0 0.0
    %57 = vmatpush.msra.mxu0 0.0
    %58 = vmatpush.msra.mxu0 0.0
    %59 = vmatpush.msra.mxu0 0.0
    %60 = vmatpush.msra.mxu0 0.0
    %61 = vmatpush.msra.mxu0 0.0
    %62 = vmatpush.msra.mxu0 0.0
    %63 = vmatpush.msra.mxu0 0.0
    %64 = vmatpush.msra.mxu0 0.0
    %65 = vmatpush.msra.mxu0 0.0
    %66 = vmatpush.msra.mxu0 0.0
    %67 = vmatpush.msra.mxu0 0.0
    %68 = vmatpush.msra.mxu0 0.0
    %69 = vmatpush.msra.mxu0 0.0
    %70 = vmatpush.msra.mxu0 %v47
    %71 = vmatpush.msra.mxu0 %v46
    %72 = vmatmul.f32.gmra.mxu0 %v54
    %v73 = vpop.f32.mrf.mxu0
    %v74 = vadd.f32 %v50, %v73
    %75 = vdwg.mxu0
    %v76 = vlaneseq
    %v77 = vand.u32 %v76, 127
    %vm78 = vcmp.lt.s32.totalorder %v77, 0
    %v79 = vsub.s32 0, %v77
    %v80 = vsel %vm78, %v79, %v77
    %v81 = vshrl.u32 %v80, 5
    %v82 = vand.u32 %v80, 31
    %v83 = vsub.s32 0, %v82
    %v84 = vsel %vm78, %v83, %v82
    %vm85 = vcmp.ne.s32.totalorder %v84, 0
    %vm86 = vcmp.lt.s32.totalorder %v84, 0
    %vm87 = vmand %vm86, %vm85
    %v88 = vadd.s32 %v84, 32
    %v89 = vsel %vm87, %v88, %v84
    %vm90 = vcmp.ne.s32.totalorder %v89, 31
    %v91 = vand.u32 2147483647, %v74
    %vm92 = vcmp.le.f32.partialorder %v91, 0.7853982
    %vm93 = vcmp.lt.s32.totalorder %v74, 0
    %v94 = vand.u32 %v74, 2139095040
    %v95 = vshrl.u32 %v94, 23
    %v96 = vsub.s32 %v95, 127
    %v97 = vand.u32 2147483647, %v74
    %v98 = vand.u32 %v97, 8388607
    %v99 = vor.u32 %v98, 8388608
    %v100 = vsub.s32 0, %v99
    %v101 = vadd.s32 %v96, 1
    %vm102 = vcmp.gt.s32.totalorder %v101, 0
    %v103 = vsel %vm102, %v101, 0
    %v104 = vshrl.u32 %v103, 5
    %v105 = vand.u32 %v103, 31
    %v106 = vsub.s32 32, %v105
    %v107 = vshrl.u32 683565275, %v106
    %v108 = vshll.u32 683565275, %v105
    %v109 = vshrl.u32 2475754826, %v106
    %v110 = vor.u32 %v108, %v109
    %v111 = vshll.u32 2475754826, %v105
    %v112 = vshrl.u32 2131351028, %v106
    %v113 = vor.u32 %v111, %v112
    %v114 = vshll.u32 2131351028, %v105
    %v115 = vshrl.u32 2102212464, %v106
    %v116 = vor.u32 %v114, %v115
    %v117 = vshll.u32 2102212464, %v105
    %v118 = vshrl.u32 920167782, %v106
    %v119 = vor.u32 %v117, %v118
    %v120 = vshll.u32 920167782, %v105
    %v121 = vshrl.u32 1326507024, %v106
    %v122 = vor.u32 %v120, %v121
    %vm123 = vcmp.lt.s32.totalorder %v104, 1
    %vm124 = vcmp.lt.s32.totalorder %v104, 2
    %vm125 = vcmp.lt.s32.totalorder %v104, 3
    %vm126 = vcmp.lt.s32.totalorder %v104, 4
    %v127 = vsel %vm123, %v107, %v110
    %v128 = vsel %vm126, %v116, 2102212464
    %v129 = vsel %vm125, %v113, %v128
    %v130 = vsel %vm124, %v127, %v129
    %v131 = vsel %vm123, %v110, %v113
    %v132 = vsel %vm126, %v119, 920167782
    %v133 = vsel %vm125, %v116, %v132
    %v134 = vsel %vm124, %v131, %v133
    %v135 = vsel %vm123, %v113, %v116
    %v136 = vsel %vm126, %v122, 1326507024
    %v137 = vsel %vm125, %v119, %v136
    %v138 = vsel %vm124, %v135, %v137
    %v139 = vshll.u32 %v99, 8
    %v140 = vand.u32 %v139, 65535
    %v141 = vshrl.u32 %v139, 16
    %v142 = vand.u32 %v138, 65535
    %v143 = vshrl.u32 %v138, 16
    %v144 = vmul.u32 %v140, %v142
    %v145 = vmul.u32 %v140, %v143
    %v146 = vmul.u32 %v141, %v142
    %v147 = vmul.u32 %v141, %v143
    %v148 = vshll.u32 %v145, 16
    %v149 = vshrl.u32 %v145, 16
    %v150 = vshll.u32 %v146, 16
    %v151 = vshrl.u32 %v146, 16
    %vm152 = vc.u32 %v144, %v148
    %v153 = vsel %vm152, 1, 0
    %v154 = vadd.s32 %v144, %v148
    %v155 = vadd.s32 %v147, %v153
    %vm156 = vc.u32 %v154, %v150
    %v157 = vsel %vm156, 1, 0
    %v158 = vadd.s32 %v154, %v150
    %v159 = vadd.s32 %v155, %v157
    %v160 = vadd.s32 %v159, %v149
    %v161 = vadd.s32 %v160, %v151
    %v162 = vand.u32 %v139, 65535
    %v163 = vshrl.u32 %v139, 16
    %v164 = vand.u32 %v134, 65535
    %v165 = vshrl.u32 %v134, 16
    %v166 = vmul.u32 %v162, %v164
    %v167 = vmul.u32 %v162, %v165
    %v168 = vmul.u32 %v163, %v164
    %v169 = vmul.u32 %v163, %v165
    %v170 = vshll.u32 %v167, 16
    %v171 = vshrl.u32 %v167, 16
    %v172 = vshll.u32 %v168, 16
    %v173 = vshrl.u32 %v168, 16
    %vm174 = vc.u32 %v166, %v170
    %v175 = vsel %vm174, 1, 0
    %v176 = vadd.s32 %v166, %v170
    %v177 = vadd.s32 %v169, %v175
    %vm178 = vc.u32 %v176, %v172
    %v179 = vsel %vm178, 1, 0
    %v180 = vadd.s32 %v176, %v172
    %v181 = vadd.s32 %v177, %v179
    %v182 = vadd.s32 %v181, %v171
    %v183 = vadd.s32 %v182, %v173
    %v184 = vmul.u32 %v139, %v130
    %v185 = vadd.s32 %v161, %v180
    %vm186 = vc.u32 %v161, %v180
    %v187 = vadd.s32 %v183, 1
    %v188 = vsel %vm186, %v187, %v183
    %v189 = vadd.s32 %v184, %v188
    %v190 = vadd.s32 %v189, 536870912
    %v191 = vshrl.u32 %v190, 30
    %v192 = vshll.u32 %v191, 30
    %v193 = vsub.s32 %v189, %v192
    %vm194 = vcmp.lt.s32.totalorder %v193, 0
    %v195 = vsub.s32 0, %v193
    %v196 = vsel %vm194, %v195, %v193
    %v197 = vclz %v196
    %v198 = vsub.s32 %v197, 2
    %vm199 = vcmp.gt.s32.totalorder 0, %v198
    %v200 = vsel %vm199, 0, %v198
    %v201 = vsub.s32 32, %v200
    %v202 = vshll.u32 %v193, %v200
    %v203 = vshrl.u32 %v185, %v201
    %v204 = vor.u32 %v202, %v203
    %v205 = vsub.s32 4294967266, %v200
    %v206 = vadd.s32 %v205, 127
    %v207 = vshll.u32 %v206, 23
    %v208 = vor.u32 4788187, %v207
    %v209 = vand.u32 2147483647, %v208
    %v211 = vcvt.s32.f32 %v204
    %v212 = vmul.f32 %v211, %v209
    %v213 = vxor.u32 %v212, 2147483648
    %v214 = vsel %vm93, %v213, %v212
    %v215 = vsub.s32 4, %v191
    %v216 = vsel %vm93, %v215, %v191
    %v217 = vsel %vm92, %v74, %v214
    %v218 = vsel %vm92, 0, %v216
    %v219 = vmul.f32 %v217, %v217
    %v220 = vmul.f32 %v219, -0.001358992
    %v221 = vadd.f32 %v220, 0.041655596
    %v222 = vmul.f32 %v219, %v221
    %v223 = vadd.f32 %v222, -0.4999988
    %v224 = vmul.f32 %v219, %v223
    %v225 = vadd.f32 1.0, %v224
    %v226 = vmul.f32 %v217, %v217
    %v227 = vmul.f32 %v226, -0.00019511016
    %v228 = vadd.f32 %v227, 0.008332121
    %v229 = vmul.f32 %v226, %v228
    %v230 = vadd.f32 %v229, -0.16666654
    %v231 = vmul.f32 %v226, %v230
    %v232 = vadd.f32 %v231, 1.0
    %v233 = vmul.f32 %v232, %v217
    %vm234 = vweird.f32 %v74
    %v235 = vadd.s32 %v218, 3
    %v236 = vand.u32 %v235, 3
    %vm237 = vcmp.lt.s32.totalorder %v236, 2
    %vm238 = vcmp.eq.s32.totalorder %v236, 0
    %v239 = vxor.u32 %v233, 2147483648
    %v240 = vsel %vm238, %v225, %v239
    %vm241 = vcmp.eq.s32.totalorder %v236, 2
    %v242 = vxor.u32 %v225, 2147483648
    %v243 = vsel %vm241, %v242, %v233
    %v244 = vsel %vm237, %v240, %v243
    %v245 = vsel %vm234, nan, %v244
    %v246 = vsel %vm90, 1, 0
    %vm247 = vcmp.eq.s32.totalorder %v246, 1
    %v248 = vsel %vm247, %v245, %v74
    %249 = vst [vmem:[#allocation7] sm:$0xff] %v248
    // Predicated region
    $region22: #{tpu_custom_call.1} parent=1 // pred_check
      _
    $region23: #{tpu_custom_call.1} parent=1 // pred_check_branch
      %251 = sbr.rel (0) target = $region25
    $region24: #{tpu_custom_call.1} parent=1 // pred_region
      %253 = vsyncadd [#allocation4], 0
      %s255 = sshll.u32 [#allocation7], 4
      %s256 = int_to_ptr.vmem [resolvable:$true] %s255
      %s257 = sshll.u32 %s3, 4
      %s258 = int_to_ptr.hbm [resolvable:$true] %s257
      %260 = dma.vmem_to_hbm [thread:$0]  %s256, 128, %s258, [#allocation4]
    $region25: #{tpu_custom_call.1} parent=1 // pred_fallthru
      _
    // Predicated region
    $region26: #{tpu_custom_call.1} parent=1 // pred_check
      _
    $region27: #{tpu_custom_call.1} parent=1 // pred_check_branch
      %262 = sbr.rel (0) target = $region29
    $region28: #{tpu_custom_call.1} parent=1 // pred_region
      %264 = dma.done [#allocation4], 128
    $region29: #{tpu_custom_call.1} parent=1 // pred_fallthru
      _
    %265 = vsyncpa [#allocation3], 1
    %266 = vsyncpa [#allocation6], 1
    %267 = vsyncpa [#allocation4], 1

</llo_original>
